<compile_context>
chip_gen: v5e
topology: v5e:2x2
jax: 0.10.0
libtpu: 0.0.40
codegen_flags: <defaults>
</compile_context>

<pallas_src>
import jax
import jax.numpy as jnp
from jax import lax
from jax.experimental import pallas as pl
from jax.experimental.pallas import tpu as pltpu


def lin_mlp_kernel(x_ref, w1T_ref, b1_ref, w2_ref, b2_ref, o_ref):
    # x_ref  : [TB, 10]  natural layout (no host-side transpose)
    # w1T_ref: [20, 10]  VMEM-resident, constant across grid steps
    # b1_ref : [20, 1]
    # w2_ref : [20, 1]
    # b2_ref : [1, 1]
    # o_ref  : [1, TB]   lane-dense output (batch on lanes)

    # hidden = tanh(W1 @ x^T + b1) -> [20, TB]
    # Transposed-RHS contraction: contract dim 1 of w1T with dim 1 of x, so the
    # MXU consumes x in its natural [TB, 10] layout (no materialized transpose).
    h = lax.dot_general(
        w1T_ref[...], x_ref[...],
        dimension_numbers=(((1,), (1,)), ((), ())),
        preferred_element_type=jnp.float32,
    )
    h = jnp.tanh(h + b1_ref[...])                         # EUP tanh, bias on VPU

    # out = tanh(w2 . h + b2) -> [1, TB]
    # N=1 layer: VPU multiply + sublane (XLU) reduce instead of an MXU matmul.
    o = jnp.sum(h * w2_ref[...], axis=0, keepdims=True) + b2_ref[...]
    o_ref[...] = jnp.tanh(o).astype(o_ref.dtype)


def _round_up(n, m):
    return ((n + m - 1) // m) * m


def lin_forward(x, w1, b1, w2, b2, *, tile_b=16384):
    """x: [B, 10]; w1: [10, 20]; b1: [1, 20]; w2: [20, 1]; b2: [1, 1] -> [B, 1]."""
    B = x.shape[0]

    if B <= tile_b:
        TB = B                                  # single grid step, full batch
    else:
        # Best-effort even step count so the "parallel" batch axis splits cleanly
        # across v7x's two TensorCores; TB kept a multiple of 128 (lane-dense out,
        # sublane-aligned x tile).
        steps = pl.cdiv(B, tile_b)
        if steps % 2:
            steps += 1
        TB = max(128, _round_up(pl.cdiv(B, steps), 128))
    grid = (pl.cdiv(B, TB),)

    # Tiny parameter reshapes only (40-80 floats); x is passed through untouched.
    w1T = w1.T                   # [20, 10]
    b1c = b1.reshape(-1, 1)      # [20, 1]
    b2c = b2.reshape(1, 1)       # [1, 1]

    outT = pl.pallas_call(
        lin_mlp_kernel,
        out_shape=jax.ShapeDtypeStruct((1, B), x.dtype),
        grid_spec=pltpu.PrefetchScalarGridSpec(
            num_scalar_prefetch=0,
            grid=grid,
            in_specs=[
                pl.BlockSpec((TB, 10), lambda i: (i, 0)),   # x tile, natural layout
                pl.BlockSpec((20, 10), lambda i: (0, 0)),   # constant -> DMA'd once
                pl.BlockSpec((20, 1), lambda i: (0, 0)),    # constant
                pl.BlockSpec((20, 1), lambda i: (0, 0)),    # constant
                pl.BlockSpec((1, 1), lambda i: (0, 0)),     # constant
            ],
            out_specs=pl.BlockSpec((1, TB), lambda i: (0, i)),
        ),
        compiler_params=pltpu.CompilerParams(
            # Independent batch tiles: allows megacore sharding on v7x.
            dimension_semantics=("parallel",),
        ),
    )(x, w1T, b1c, w2, b2c)

    # [1, B] -> [B, 1] is a pure reshape (no data movement).
    return outT.reshape(B, 1)


lin_forward_jit = jax.jit(lin_forward, static_argnames=("tile_b",))


def init_params(key):
    # Deterministic init mimicking PyTorch nn.Linear default (uniform +-1/sqrt(fan_in)).
    k1, k2, k3, k4 = jax.random.split(key, 4)
    in1, out1 = 10, 20
    in2, out2 = 20, 1
    bound1 = 1.0 / jnp.sqrt(in1)
    bound2 = 1.0 / jnp.sqrt(in2)
    w1 = jax.random.uniform(k1, (in1, out1), jnp.float32, -bound1, bound1)
    b1 = jax.random.uniform(k2, (1, out1), jnp.float32, -bound1, bound1)
    w2 = jax.random.uniform(k3, (in2, out2), jnp.float32, -bound2, bound2)
    b2 = jax.random.uniform(k4, (1, out2), jnp.float32, -bound2, bound2)
    return w1, b1, w2, b2


if __name__ == "__main__":
    key = jax.random.PRNGKey(0)
    pkey, xkey1, xkey2 = jax.random.split(key, 3)
    w1, b1, w2, b2 = init_params(pkey)

    def ref_fn(xx):
        return jnp.tanh(jnp.tanh(xx @ w1 + b1) @ w2 + b2)

    # Small case: single grid step, lane dim = full (small) batch.
    x_small = jax.random.normal(xkey1, (8, 10), jnp.float32)
    out_small = jax.block_until_ready(lin_forward_jit(x_small, w1, b1, w2, b2))
    assert out_small.shape == (8, 1)
    assert jnp.allclose(out_small, ref_fn(x_small), atol=1e-5, rtol=1e-5)

    # Tiled case: forces a multi-step grid (tile_b=512 -> TB=384, 3 steps) to
    # exercise VMEM-resident weights and a ragged final batch tile.
    x_big = jax.random.normal(xkey2, (1030, 10), jnp.float32)
    out_big = jax.block_until_ready(
        lin_forward_jit(x_big, w1, b1, w2, b2, tile_b=512))
    assert out_big.shape == (1030, 1)
    assert jnp.allclose(out_big, ref_fn(x_big), atol=1e-5, rtol=1e-5)

    print("KERNEL_OK")
</pallas_src>

<mosaic_0001>
module attributes {stable_mosaic.version = 11 : i64} {
  func.func @lin_mlp_kernel(%arg0: i32, %arg1: memref<8x10xf32, #tpu.memory_space<vmem>>, %arg2: memref<20x10xf32, #tpu.memory_space<vmem>>, %arg3: memref<20x1xf32, #tpu.memory_space<vmem>>, %arg4: memref<20x1xf32, #tpu.memory_space<vmem>>, %arg5: memref<1x1xf32, #tpu.memory_space<vmem>>, %arg6: memref<1x8xf32, #tpu.memory_space<vmem>>) attributes {dimension_semantics = [#tpu.dimension_semantics<parallel>], iteration_bounds = array<i64: 1>, scalar_prefetch = 0 : i64, scratch_operands = 0 : i64, tpu.core_type = #tpu.core_type<tc>, window_params = [{transform_indices = @transform_0, window_bounds = array<i64: 8, 10>}, {pipeline_mode = #tpu.pipeline_mode<synchronous>, transform_indices = @transform_1, window_bounds = array<i64: 20, 10>}, {pipeline_mode = #tpu.pipeline_mode<synchronous>, transform_indices = @transform_2, window_bounds = array<i64: 20, 1>}, {pipeline_mode = #tpu.pipeline_mode<synchronous>, transform_indices = @transform_3, window_bounds = array<i64: 20, 1>}, {pipeline_mode = #tpu.pipeline_mode<synchronous>, transform_indices = @transform_4, window_bounds = array<i64: 1, 1>}, {transform_indices = @transform_5, window_bounds = array<i64: 1, 8>}]} {
    %c0 = arith.constant 0 : index
    %c0_0 = arith.constant 0 : index
    %0 = vector.load %arg2[%c0, %c0_0] : memref<20x10xf32, #tpu.memory_space<vmem>>, vector<20x10xf32>
    %c0_1 = arith.constant 0 : index
    %c0_2 = arith.constant 0 : index
    %1 = vector.load %arg1[%c0_1, %c0_2] : memref<8x10xf32, #tpu.memory_space<vmem>>, vector<8x10xf32>
    %cst = arith.constant dense<0.000000e+00> : vector<20x8xf32>
    %2 = tpu.matmul %0, %1, %cst {dimension_numbers = #tpu.dot_dimension_numbers<[1], [1], [0], [0], [0, 0, 1, 0], [], []>} : vector<20x10xf32>, vector<8x10xf32>, vector<20x8xf32> -> vector<20x8xf32>
    %c0_3 = arith.constant 0 : index
    %c0_4 = arith.constant 0 : index
    %3 = vector.load %arg3[%c0_3, %c0_4] : memref<20x1xf32, #tpu.memory_space<vmem>>, vector<20x1xf32>
    %4 = vector.broadcast %3 : vector<20x1xf32> to vector<20x8xf32>
    %5 = arith.addf %2, %4 : vector<20x8xf32>
    %6 = math.tanh %5 : vector<20x8xf32>
    %c0_5 = arith.constant 0 : index
    %c0_6 = arith.constant 0 : index
    %7 = vector.load %arg4[%c0_5, %c0_6] : memref<20x1xf32, #tpu.memory_space<vmem>>, vector<20x1xf32>
    %8 = vector.broadcast %7 : vector<20x1xf32> to vector<20x8xf32>
    %9 = arith.mulf %6, %8 : vector<20x8xf32>
    %cst_7 = arith.constant dense<0.000000e+00> : vector<8xf32>
    %10 = vector.multi_reduction <add>, %9, %cst_7 [0] : vector<20x8xf32> to vector<8xf32>
    %11 = vector.shape_cast %10 : vector<8xf32> to vector<1x8xf32>
    %c0_8 = arith.constant 0 : index
    %c0_9 = arith.constant 0 : index
    %12 = vector.load %arg5[%c0_8, %c0_9] : memref<1x1xf32, #tpu.memory_space<vmem>>, vector<1x1xf32>
    %13 = vector.broadcast %12 : vector<1x1xf32> to vector<1x8xf32>
    %14 = arith.addf %11, %13 : vector<1x8xf32>
    %15 = math.tanh %14 : vector<1x8xf32>
    %c0_10 = arith.constant 0 : index
    %c0_11 = arith.constant 0 : index
    %16 = vector.load %arg6[%c0_10, %c0_11] : memref<1x8xf32, #tpu.memory_space<vmem>>, vector<1x8xf32>
    tpu.vector_store %arg6[%c0_10, %c0_11], %15 {strides = array<i32>} : memref<1x8xf32, #tpu.memory_space<vmem>>, vector<1x8xf32>,
    return
  }
  func.func @transform_0(%arg0: i32) -> (i32, i32) {
    %c0_i32 = arith.constant 0 : i32
    %c0_i32_0 = arith.constant 0 : i32
    return %arg0, %c0_i32 : i32, i32
  }
  func.func @transform_1(%arg0: i32) -> (i32, i32) {
    %c0_i32 = arith.constant 0 : i32
    %c0_i32_0 = arith.constant 0 : i32
    %c0_i32_1 = arith.constant 0 : i32
    return %c0_i32, %c0_i32_0 : i32, i32
  }
  func.func @transform_2(%arg0: i32) -> (i32, i32) {
    %c0_i32 = arith.constant 0 : i32
    %c0_i32_0 = arith.constant 0 : i32
    %c0_i32_1 = arith.constant 0 : i32
    return %c0_i32, %c0_i32_0 : i32, i32
  }
  func.func @transform_3(%arg0: i32) -> (i32, i32) {
    %c0_i32 = arith.constant 0 : i32
    %c0_i32_0 = arith.constant 0 : i32
    %c0_i32_1 = arith.constant 0 : i32
    return %c0_i32, %c0_i32_0 : i32, i32
  }
  func.func @transform_4(%arg0: i32) -> (i32, i32) {
    %c0_i32 = arith.constant 0 : i32
    %c0_i32_0 = arith.constant 0 : i32
    %c0_i32_1 = arith.constant 0 : i32
    return %c0_i32, %c0_i32_0 : i32, i32
  }
  func.func @transform_5(%arg0: i32) -> (i32, i32) {
    %c0_i32 = arith.constant 0 : i32
    %c0_i32_0 = arith.constant 0 : i32
    return %c0_i32, %arg0 : i32, i32
  }
}

</mosaic_0001>

<llo_original>
// kernel: lin_forward.1
$region0: #{lin_forward.1}
  #allocation0 [shape = 'u32[]', space=smem, size = 0x4, offset = 0x4, fixed_abs, tag = 'smem constant byte address 0x4 - core index']
  #allocation1 [shape = 'u32[72,128]{1,0:T(1,128)}', space=vmem, size = 0x9000, scoped, tag = 'internal scratch']
  #allocation2 [shape = 'f32[1,1]{1,0:T(1,128)S(1)}', space=vmem, size = 0x200, scoped, tag = 'scoped memory for lin_forward.1']
  %s0 = inlined_call_operand.vmem [shape: f32[8,10], index: 0, kind: input, shape index: {}]
  %s1 = inlined_call_operand.vmem [shape: f32[20,10], index: 1, kind: input, shape index: {}]
  %s2 = inlined_call_operand.vmem [shape: f32[20,1], index: 2, kind: input, shape index: {}]
  %s3 = inlined_call_operand.vmem [shape: f32[20,1], index: 3, kind: input, shape index: {}]
  %s4 = inlined_call_operand.<no memory space> [shape: f32[1,1], index: 4, kind: input, shape index: {}]
  %s5 = inlined_call_operand.hbm [shape: f32[1,8], index: 5, kind: output, shape index: {}]
  %s6 = sld [smem:[#allocation0]]
  $region30: #{lin_forward.1} parent=0
    _
  %s8 = ssub.s32 1, %s6
  %s9 = scalar_select 0, %s8, %s6
  %v10 = vstv %s4
  %11 = vst [vmem:[#allocation2] sm:$0x1] %v10
  $region1: #{lin_forward.1} parent=0
    #allocation3 [shape = 'u8[512]{0}', space=vmem, size = 0x400, scoped, tag = 'output window, operand 0, single buffered']
    #allocation4 [shape = 's32[1]{0}', space=sflag, size = 0x4, scoped, tag = 'scoped memory for lin_forward.1']
    %12 = vsyncpa [#allocation4], 0
    // Predicated region
    $region2: #{lin_forward.1} parent=1 // pred_check
      _
    $region3: #{lin_forward.1} parent=1 // pred_check_branch
      %14 = sbr.rel (0) target = $region5
    $region4: #{lin_forward.1} parent=1 // pred_region
      _
    $region5: #{lin_forward.1} parent=1 // pred_fallthru
      _
    // Predicated region
    $region6: #{lin_forward.1} parent=1 // pred_check
      _
    $region7: #{lin_forward.1} parent=1 // pred_check_branch
      %16 = sbr.rel (0) target = $region9
    $region8: #{lin_forward.1} parent=1 // pred_region
      _
    $region9: #{lin_forward.1} parent=1 // pred_fallthru
      _
    // Predicated region
    $region10: #{lin_forward.1} parent=1 // pred_check
      _
    $region11: #{lin_forward.1} parent=1 // pred_check_branch
      %18 = sbr.rel (0) target = $region13
    $region12: #{lin_forward.1} parent=1 // pred_region
      _
    $region13: #{lin_forward.1} parent=1 // pred_fallthru
      _
    // Predicated region
    $region14: #{lin_forward.1} parent=1 // pred_check
      _
    $region15: #{lin_forward.1} parent=1 // pred_check_branch
      %20 = sbr.rel (0) target = $region17
    $region16: #{lin_forward.1} parent=1 // pred_region
      _
    $region17: #{lin_forward.1} parent=1 // pred_fallthru
      _
    // Predicated region
    $region18: #{lin_forward.1} parent=1 // pred_check
      _
    $region19: #{lin_forward.1} parent=1 // pred_check_branch
      %22 = sbr.rel (0) target = $region21
    $region20: #{lin_forward.1} parent=1 // pred_region
      _
    $region21: #{lin_forward.1} parent=1 // pred_fallthru
      _
    %v23 = vld [vmem:[%s1] sm:$0xff]
    %v24 = vld [vmem:[%s1 + $0x8] sm:$0xff]
    %v25 = vld [vmem:[%s1 + $0x10] sm:$0xf]
    %v26 = vld [vmem:[%s0] sm:$0xff]
    %v27 = vld [vmem:[%s2] sm:$0xff]
    %v28 = vld [vmem:[%s2 + $0x8] sm:$0xff]
    %v29 = vld [vmem:[%s2 + $0x10] sm:$0xf]
    %31 = vset.pattern.permute.xlu0 0
    %32 = vperm.xlu0 %31, %v27
    %v33 = vpop.permute.xlu0 %32
    %36 = vset.pattern.permute.xlu0 0
    %37 = vperm.xlu0 %36, %v28
    %v38 = vpop.permute.xlu0 %37
    %41 = vset.pattern.permute.xlu0 0
    %42 = vperm.xlu0 %41, %v29
    %v43 = vpop.permute.xlu0 %42
    %vm45 = vcmask 80896
    %v47 = vsel %vm45, %v23, 0
    %v50 = vsel %vm45, %v24, 0
    %v53 = vsel %vm45, %v25, 0
    %v56 = vsel %vm45, %v26, 0
    %58 = vmatpush.xpose.msra.mxu0 0.0
    %59 = vmatpush.xpose.msra.mxu0 0.0
    %60 = vmatpush.xpose.msra.mxu0 0.0
    %61 = vmatpush.xpose.msra.mxu0 0.0
    %62 = vmatpush.xpose.msra.mxu0 0.0
    %63 = vmatpush.xpose.msra.mxu0 0.0
    %64 = vmatpush.xpose.msra.mxu0 0.0
    %65 = vmatpush.xpose.msra.mxu0 0.0
    %66 = vmatpush.xpose.msra.mxu0 0.0
    %67 = vmatpush.xpose.msra.mxu0 0.0
    %68 = vmatpush.xpose.msra.mxu0 0.0
    %69 = vmatpush.xpose.msra.mxu0 0.0
    %70 = vmatpush.xpose.msra.mxu0 0.0
    %71 = vmatpush.xpose.msra.mxu0 0.0
    %72 = vmatpush.xpose.msra.mxu0 0.0
    %73 = vmatpush.xpose.msra.mxu0 %v56
    %74 = vmatmul.f32.gmra.mxu0 %v47
    %v75 = vpop.f32.mrf.mxu0
    %v76 = vadd.f32 %v33, %v75
    %77 = vmatmul.f32.gmra.mxu0 %v50
    %v78 = vpop.f32.mrf.mxu0
    %v79 = vadd.f32 %v38, %v78
    %80 = vmatmul.f32.gmra.mxu0 %v53
    %v81 = vpop.f32.mrf.mxu0
    %v82 = vadd.f32 %v43, %v81
    %83 = vdwg.mxu0
    %v84 = vtanh.pop %v76
    %v85 = vtanh.pop %v79
    %v86 = vtanh.pop %v82
    %v87 = vld [vmem:[%s3] sm:$0xff]
    %v88 = vld [vmem:[%s3 + $0x8] sm:$0xff]
    %v89 = vld [vmem:[%s3 + $0x10] sm:$0xf]
    %91 = vset.pattern.permute.xlu0 0
    %92 = vperm.xlu0 %91, %v87
    %v93 = vpop.permute.xlu0 %92
    %96 = vset.pattern.permute.xlu0 0
    %97 = vperm.xlu0 %96, %v88
    %v98 = vpop.permute.xlu0 %97
    %101 = vset.pattern.permute.xlu0 0
    %102 = vperm.xlu0 %101, %v89
    %v103 = vpop.permute.xlu0 %102
    %v105 = vmul.f32 %v84, %v93
    %v106 = vmul.f32 %v85, %v98
    %v107 = vmul.f32 %v86, %v103
    %vm108 = vcmask 64512
    %v109 = vsel %vm108, %v105, 0.0
    %v110 = vsel %vm108, %v106, 0.0
    %v111 = vadd.f32 %v109, %v110
    %vm112 = vcmask 60416
    %v113 = vsel %vm112, %v107, 0.0
    %v114 = vadd.f32 %v111, %v113
    %v115 = vrot.slane %v114, 4
    %v116 = vadd.f32 %v114, %v115
    %v117 = vrot.slane %v116, 2
    %v118 = vadd.f32 %v116, %v117
    %v119 = vrot.slane %v118, 1
    %v120 = vadd.f32 %v118, %v119
    %v121 = vld [vmem:[#allocation2] sm:$0x1]
    %123 = vset.pattern.permute.xlu0 0
    %124 = vperm.xlu0 %123, %v121
    %v125 = vpop.permute.xlu0 %124
    %v127 = vperm.slane %v125, 0
    %v128 = vadd.f32 %v120, %v127
    %v129 = vtanh.pop %v128
    %vm130 = vcmask 57344
    %131 = vst.msk [vmem:[#allocation3] sm:$0x1] %vm130, %v129
    // Predicated region
    $region22: #{lin_forward.1} parent=1 // pred_check
      _
    $region23: #{lin_forward.1} parent=1 // pred_check_branch
      %133 = sbr.rel (0) target = $region25
    $region24: #{lin_forward.1} parent=1 // pred_region
      %135 = vsyncadd [#allocation4], 0
      %s137 = sshll.u32 [#allocation3], 4
      %s138 = int_to_ptr.vmem [resolvable:$true] %s137
      %s139 = sshll.u32 %s5, 4
      %s140 = int_to_ptr.hbm [resolvable:$true] %s139
      %142 = dma.vmem_to_hbm [thread:$0]  %s138, 16, %s140, [#allocation4]
    $region25: #{lin_forward.1} parent=1 // pred_fallthru
      _
    // Predicated region
    $region26: #{lin_forward.1} parent=1 // pred_check
      _
    $region27: #{lin_forward.1} parent=1 // pred_check_branch
      %144 = sbr.rel (0) target = $region29
    $region28: #{lin_forward.1} parent=1 // pred_region
      %146 = dma.done [#allocation4], 16
    $region29: #{lin_forward.1} parent=1 // pred_fallthru
      _
    %147 = vsyncpa [#allocation4], 1

</llo_original>
